<compile_context>
chip_gen: v5e
topology: v5e:2x2
jax: 0.10.0
libtpu: 0.0.40
codegen_flags: <defaults>
</compile_context>

<pallas_src>
import functools

import jax
import jax.numpy as jnp
from jax.experimental import pallas as pl
from jax.experimental.pallas import tpu as pltpu


def _head_kernel(
    feat_ref,   # (Bb, Tt, H)  original feature dtype
    lens_ref,   # (Bb, 1)      f32
    wc_ref,     # (H, H)       mm_dtype  dense rows 0:H        (cls part)
    wl_ref,     # (1, H)       f32       dense row  H          (length part)
    we_ref,     # (H, H)       mm_dtype  dense rows H+1:2H+1   (embs part)
    db_ref,     # (1, H)       f32       dense bias
    ow_ref,     # (H, Lp)      mm_dtype  out_proj weight, lane-padded
    ob_ref,     # (1, Lp)      f32       out_proj bias, lane-padded
    o_ref,      # (Bb, Lp)     f32
    cls_sc,     # (Bb, H)      f32 scratch: token-0 row
    sum_sc,     # (Bb, H)      f32 scratch: running sum over all tokens
    *,
    inv_tm1,    # python float: 1 / (T - 1)
    mm_dtype,   # MXU dtype for the three matmuls
):
    t = pl.program_id(1)

    fblk = feat_ref[...]                                    # no full-block f32 copy
    blk_sum = jnp.sum(fblk, axis=1, dtype=jnp.float32)      # (Bb, H) f32 token sum

    @pl.when(t == 0)
    def _():
        cls_sc[...] = fblk[:, 0, :].astype(jnp.float32)
        sum_sc[...] = blk_sum

    @pl.when(t != 0)
    def _():
        sum_sc[...] = sum_sc[...] + blk_sum

    @pl.when(t == pl.num_programs(1) - 1)
    def _():
        cls = cls_sc[...]                                    # (Bb, H) f32
        embs = (sum_sc[...] - cls) * jnp.float32(inv_tm1)    # mean over tokens 1..T-1
        # dense(cat([cls, lens, embs])) without materializing the (Bb, 2H+1) concat
        x = (
            jnp.dot(cls.astype(mm_dtype), wc_ref[...],
                    preferred_element_type=jnp.float32)
            + jnp.dot(embs.astype(mm_dtype), we_ref[...],
                      preferred_element_type=jnp.float32)
            + lens_ref[...] * wl_ref[...]                    # (Bb,1)*(1,H) rank-1 (VPU)
            + db_ref[...]
        )
        h = jnp.tanh(x)                                      # dropout = identity (eval)
        logits = (
            jnp.dot(h.astype(mm_dtype), ow_ref[...],
                    preferred_element_type=jnp.float32)
            + ob_ref[...]
        )                                                    # (Bb, Lp) lane-dense
        o_ref[...] = logits.astype(o_ref.dtype)


def prepare_params(params, *, matmul_dtype=jnp.bfloat16):
    """One-time weight prep: split dense rows, cast matmul pieces, lane-pad out_proj."""
    dense_w = params["dense_w"]                  # (2H+1, H), forward semantics
    H = dense_w.shape[1]
    out_w = params["out_w"]                      # (H, L)
    L = out_w.shape[1]
    Lp = max(128, pl.cdiv(L, 128) * 128)         # lane-dense output width
    return {
        "wc": dense_w[:H].astype(matmul_dtype),
        "wl": dense_w[H:H + 1].astype(jnp.float32),
        "we": dense_w[H + 1:].astype(matmul_dtype),
        "db": params["dense_b"].reshape(1, H).astype(jnp.float32),
        "ow": jnp.zeros((H, Lp), jnp.float32).at[:, :L].set(out_w).astype(matmul_dtype),
        "ob": jnp.zeros((1, Lp), jnp.float32).at[:, :L].set(params["out_b"].reshape(1, L)),
        "num_labels": L,
        "padded_labels": Lp,
        "matmul_dtype": matmul_dtype,
    }


def _pick_batch_tile(B, block_b):
    if B <= 8:
        return B
    bb = max(8, (min(block_b, B) // 8) * 8)
    if B >= 16:
        # keep >= 2 grid steps on the batch axis so both v7x TensorCores get work
        bb = min(bb, max(8, ((B // 2) // 8) * 8))
    return bb


def _pick_token_tile(T, max_tt):
    if T <= max_tt:
        return T
    best, d = 0, 8
    while d <= max_tt:                 # largest multiple-of-8 divisor of T within budget
        if T % d == 0:
            best = d
        d += 8
    return best if best > 0 else T     # fallback: whole T (always correct)


def roberta_head_joined_length(
    features, sent_a_length, attention_mask, params, *,
    block_b=64,
    matmul_dtype=jnp.bfloat16,
    feat_vmem_budget_bytes=24 << 20,   # budget for the double-buffered feature stream
    vmem_limit_bytes=48 << 20,         # fits v5e/v6e (128 MiB) and v7x (64 MiB) VMEM
):
    """attention_mask is accepted for API parity but unused by this head."""
    del attention_mask
    B, T, H = features.shape

    prep = params if "wc" in params else prepare_params(params, matmul_dtype=matmul_dtype)
    L, Lp = prep["num_labels"], prep["padded_labels"]
    mm_dtype = prep["matmul_dtype"]

    lens = sent_a_length.astype(jnp.float32)     # (B, 1) scalar column, stays on the VPU

    Bb = _pick_batch_tile(B, block_b)
    itemsize = jnp.dtype(features.dtype).itemsize
    max_tt = max(1, feat_vmem_budget_bytes // (2 * Bb * H * itemsize))
    Tt = _pick_token_tile(T, max_tt)             # divides T by construction
    grid = (pl.cdiv(B, Bb), T // Tt)

    inv_tm1 = 1.0 / (T - 1) if T > 1 else 0.0

    nbytes = lambda a: int(a.size) * jnp.dtype(a.dtype).itemsize
    cost = pl.CostEstimate(
        flops=int(B * T * H                      # token sum
                  + 2 * B * H * H * 2            # two (Bb,H)@(H,H) matmuls
                  + 2 * B * H * Lp               # out_proj
                  + 6 * B * H),                  # rank-1 update, biases, mean scale
        transcendentals=int(B * H),              # tanh
        bytes_accessed=int(nbytes(features) + nbytes(lens)
                           + sum(nbytes(prep[k]) for k in ("wc", "wl", "we", "db", "ow", "ob"))
                           + B * Lp * 4),
    )

    kern = functools.partial(_head_kernel, inv_tm1=inv_tm1, mm_dtype=mm_dtype)
    w2d = lambda i, t: (0, 0)

    def _const_spec(shape, single_buffer):
        if single_buffer:
            # constant index_map -> block is DMA'd once; don't reserve 2x VMEM for it
            return pl.BlockSpec(shape, w2d, pipeline_mode=pl.Buffered(1))
        return pl.BlockSpec(shape, w2d)

    def _call(single_buffer_weights):
        in_specs = [
            pl.BlockSpec((Bb, Tt, H), lambda i, t: (i, t, 0)),
            pl.BlockSpec((Bb, 1), lambda i, t: (i, 0)),
            _const_spec((H, H), single_buffer_weights),
            _const_spec((1, H), single_buffer_weights),
            _const_spec((H, H), single_buffer_weights),
            _const_spec((1, H), single_buffer_weights),
            _const_spec((H, Lp), single_buffer_weights),
            _const_spec((1, Lp), single_buffer_weights),
        ]
        return pl.pallas_call(
            kern,
            out_shape=jax.ShapeDtypeStruct((B, Lp), jnp.float32),
            grid=grid,
            in_specs=in_specs,
            out_specs=pl.BlockSpec((Bb, Lp), lambda i, t: (i, 0)),
            scratch_shapes=[pltpu.VMEM((Bb, H), jnp.float32),    # cls scratch
                            pltpu.VMEM((Bb, H), jnp.float32)],   # token-sum scratch
            compiler_params=pltpu.CompilerParams(
                dimension_semantics=("parallel", "arbitrary"),
                vmem_limit_bytes=int(vmem_limit_bytes) if vmem_limit_bytes else None),
            cost_estimate=cost,
        )(features, lens, prep["wc"], prep["wl"], prep["we"],
          prep["db"], prep["ow"], prep["ob"])

    try:
        out_padded = _call(True)
    except Exception:   # pipeline_mode=pl.Buffered(1) unsupported on this JAX -> default buffering
        out_padded = _call(False)
    return out_padded[:, :L]


def init_params(key, hidden_size, num_labels):
    """Deterministic synthetic parameters (PyTorch Linear shapes, pre-transposed)."""
    H, L = hidden_size, num_labels
    ks = jax.random.split(key, 4)
    s = 0.05
    return {
        # dense: Linear(2H+1, H) per the forward semantics (cls + length + embs)
        "dense_w": s * jax.random.normal(ks[0], (2 * H + 1, H), jnp.float32),
        "dense_b": s * jax.random.normal(ks[1], (1, H), jnp.float32),
        # out_proj: Linear(H, L)
        "out_w": s * jax.random.normal(ks[2], (H, L), jnp.float32),
        "out_b": s * jax.random.normal(ks[3], (1, L), jnp.float32),
    }


def reference(features, sent_a_length, attention_mask, p):
    """Pure-JAX reference mirroring the PyTorch forward (eval mode)."""
    del attention_mask
    x = features[:, 0, :]
    x = jnp.concatenate([x, sent_a_length], axis=1)
    embs = features[:, 1:, :].mean(axis=1)
    x = jnp.concatenate([x, embs], axis=1)
    x = jnp.tanh(x @ p["dense_w"] + p["dense_b"][0])
    return x @ p["out_w"] + p["out_b"][0]


if __name__ == "__main__":
    B, T, H, L = 2, 8, 32, 3
    key = jax.random.PRNGKey(0)
    k_feat, k_len, k_mask, k_par = jax.random.split(key, 4)

    features = jax.random.normal(k_feat, (B, T, H), jnp.float32)
    sent_a_length = jax.random.randint(k_len, (B, 1), 1, T).astype(jnp.float32)
    attention_mask = (jax.random.uniform(k_mask, (B, T)) > 0.2).astype(jnp.float32)  # unused

    params = init_params(k_par, H, L)
    ref = reference(features, sent_a_length, attention_mask, params)

    # f32 MXU path: tight check against the reference (raw params prepared internally).
    out_f32 = roberta_head_joined_length(features, sent_a_length, attention_mask,
                                         params, matmul_dtype=jnp.float32)
    out_f32 = jax.block_until_ready(out_f32)
    assert out_f32.shape == (B, L), out_f32.shape
    assert jnp.allclose(out_f32, ref, atol=1e-4, rtol=1e-4), (out_f32, ref)

    # Default bf16-MXU path with weights prepared once up front (production path).
    prepared = prepare_params(params)            # one-time split/cast/pad
    out_bf16 = roberta_head_joined_length(features, sent_a_length, attention_mask, prepared)
    out_bf16 = jax.block_until_ready(out_bf16)
    assert out_bf16.shape == (B, L), out_bf16.shape
    assert jnp.allclose(out_bf16, ref, atol=2e-2, rtol=2e-2), (out_bf16, ref)

    print("KERNEL_OK")
</pallas_src>

<mosaic_0001>
module attributes {stable_mosaic.version = 11 : i64} {
  func.func @_head_kernel(%arg0: i32, %arg1: i32, %arg2: memref<2x8x32xf32, #tpu.memory_space<vmem>>, %arg3: memref<2x1xf32, #tpu.memory_space<vmem>>, %arg4: memref<32x32xf32, #tpu.memory_space<vmem>>, %arg5: memref<1x32xf32, #tpu.memory_space<vmem>>, %arg6: memref<32x32xf32, #tpu.memory_space<vmem>>, %arg7: memref<1x32xf32, #tpu.memory_space<vmem>>, %arg8: memref<32x128xf32, #tpu.memory_space<vmem>>, %arg9: memref<1x128xf32, #tpu.memory_space<vmem>>, %arg10: memref<2x128xf32, #tpu.memory_space<vmem>>, %arg11: memref<2x32xf32, #tpu.memory_space<vmem>>, %arg12: memref<2x32xf32, #tpu.memory_space<vmem>>) attributes {dimension_semantics = [#tpu.dimension_semantics<parallel>, #tpu.dimension_semantics<arbitrary>], iteration_bounds = array<i64: 1, 1>, scalar_prefetch = 0 : i64, scratch_operands = 2 : i64, tpu.core_type = #tpu.core_type<tc>, window_params = [{transform_indices = @transform_0, window_bounds = array<i64: 2, 8, 32>}, {transform_indices = @transform_1, window_bounds = array<i64: 2, 1>}, {pipeline_mode = #tpu.pipeline_mode<synchronous>, transform_indices = @transform_2, window_bounds = array<i64: 32, 32>}, {pipeline_mode = #tpu.pipeline_mode<synchronous>, transform_indices = @transform_3, window_bounds = array<i64: 1, 32>}, {pipeline_mode = #tpu.pipeline_mode<synchronous>, transform_indices = @transform_4, window_bounds = array<i64: 32, 32>}, {pipeline_mode = #tpu.pipeline_mode<synchronous>, transform_indices = @transform_5, window_bounds = array<i64: 1, 32>}, {pipeline_mode = #tpu.pipeline_mode<synchronous>, transform_indices = @transform_6, window_bounds = array<i64: 32, 128>}, {pipeline_mode = #tpu.pipeline_mode<synchronous>, transform_indices = @transform_7, window_bounds = array<i64: 1, 128>}, {transform_indices = @transform_8, window_bounds = array<i64: 2, 128>}]} {
    %c0 = arith.constant 0 : index
    %c0_0 = arith.constant 0 : index
    %c0_1 = arith.constant 0 : index
    %0 = vector.load %arg2[%c0, %c0_0, %c0_1] : memref<2x8x32xf32, #tpu.memory_space<vmem>>, vector<2x8x32xf32>
    %cst = arith.constant dense<0.000000e+00> : vector<2x32xf32>
    %1 = vector.multi_reduction <add>, %0, %cst [1] : vector<2x8x32xf32> to vector<2x32xf32>
    %c0_i32 = arith.constant 0 : i32
    %2 = arith.cmpi eq, %arg1, %c0_i32 : i32
    %3 = arith.extui %2 : i1 to i32
    %c0_i32_2 = arith.constant 0 : i32
    %4 = arith.cmpi ne, %3, %c0_i32_2 : i32
    scf.if %4 {
      %11 = vector.extract_strided_slice %0 {offsets = [0, 0, 0], sizes = [2, 1, 32], strides = [1, 1, 1]} : vector<2x8x32xf32> to vector<2x1x32xf32>
      %12 = vector.shape_cast %11 : vector<2x1x32xf32> to vector<2x32xf32>
      %c0_7 = arith.constant 0 : index
      %c0_8 = arith.constant 0 : index
      %13 = vector.load %arg11[%c0_7, %c0_8] : memref<2x32xf32, #tpu.memory_space<vmem>>, vector<2x32xf32>
      tpu.vector_store %arg11[%c0_7, %c0_8], %12 {strides = array<i32>} : memref<2x32xf32, #tpu.memory_space<vmem>>, vector<2x32xf32>,
      %c0_9 = arith.constant 0 : index
      %c0_10 = arith.constant 0 : index
      %14 = vector.load %arg12[%c0_9, %c0_10] : memref<2x32xf32, #tpu.memory_space<vmem>>, vector<2x32xf32>
      tpu.vector_store %arg12[%c0_9, %c0_10], %1 {strides = array<i32>} : memref<2x32xf32, #tpu.memory_space<vmem>>, vector<2x32xf32>,
    } else {
    }
    %c0_i32_3 = arith.constant 0 : i32
    %5 = arith.cmpi ne, %arg1, %c0_i32_3 : i32
    %6 = arith.extui %5 : i1 to i32
    %c0_i32_4 = arith.constant 0 : i32
    %7 = arith.cmpi ne, %6, %c0_i32_4 : i32
    scf.if %7 {
      %c0_7 = arith.constant 0 : index
      %c0_8 = arith.constant 0 : index
      %11 = vector.load %arg12[%c0_7, %c0_8] : memref<2x32xf32, #tpu.memory_space<vmem>>, vector<2x32xf32>
      %12 = arith.addf %11, %1 : vector<2x32xf32>
      %c0_9 = arith.constant 0 : index
      %c0_10 = arith.constant 0 : index
      %13 = vector.load %arg12[%c0_9, %c0_10] : memref<2x32xf32, #tpu.memory_space<vmem>>, vector<2x32xf32>
      tpu.vector_store %arg12[%c0_9, %c0_10], %12 {strides = array<i32>} : memref<2x32xf32, #tpu.memory_space<vmem>>, vector<2x32xf32>,
    } else {
    }
    %c0_i32_5 = arith.constant 0 : i32
    %8 = arith.cmpi eq, %arg1, %c0_i32_5 : i32
    %9 = arith.extui %8 : i1 to i32
    %c0_i32_6 = arith.constant 0 : i32
    %10 = arith.cmpi ne, %9, %c0_i32_6 : i32
    scf.if %10 {
      %c0_7 = arith.constant 0 : index
      %c0_8 = arith.constant 0 : index
      %11 = vector.load %arg11[%c0_7, %c0_8] : memref<2x32xf32, #tpu.memory_space<vmem>>, vector<2x32xf32>
      %c0_9 = arith.constant 0 : index
      %c0_10 = arith.constant 0 : index
      %12 = vector.load %arg12[%c0_9, %c0_10] : memref<2x32xf32, #tpu.memory_space<vmem>>, vector<2x32xf32>
      %13 = arith.subf %12, %11 : vector<2x32xf32>
      %cst_11 = arith.constant 0.142857149 : f32
      %14 = vector.broadcast %cst_11 : f32 to vector<2x32xf32>
      %15 = arith.mulf %13, %14 : vector<2x32xf32>
      %c0_12 = arith.constant 0 : index
      %c0_13 = arith.constant 0 : index
      %16 = vector.load %arg4[%c0_12, %c0_13] : memref<32x32xf32, #tpu.memory_space<vmem>>, vector<32x32xf32>
      %cst_14 = arith.constant dense<0.000000e+00> : vector<2x32xf32>
      %17 = tpu.matmul %11, %16, %cst_14 {dimension_numbers = #tpu.dot_dimension_numbers<[1], [0], [0], [1], [0, 0, 1, 1], [], []>} : vector<2x32xf32>, vector<32x32xf32>, vector<2x32xf32> -> vector<2x32xf32>
      %c0_15 = arith.constant 0 : index
      %c0_16 = arith.constant 0 : index
      %18 = vector.load %arg6[%c0_15, %c0_16] : memref<32x32xf32, #tpu.memory_space<vmem>>, vector<32x32xf32>
      %cst_17 = arith.constant dense<0.000000e+00> : vector<2x32xf32>
      %19 = tpu.matmul %15, %18, %cst_17 {dimension_numbers = #tpu.dot_dimension_numbers<[1], [0], [0], [1], [0, 0, 1, 1], [], []>} : vector<2x32xf32>, vector<32x32xf32>, vector<2x32xf32> -> vector<2x32xf32>
      %20 = arith.addf %17, %19 : vector<2x32xf32>
      %c0_18 = arith.constant 0 : index
      %c0_19 = arith.constant 0 : index
      %21 = vector.load %arg3[%c0_18, %c0_19] : memref<2x1xf32, #tpu.memory_space<vmem>>, vector<2x1xf32>
      %c0_20 = arith.constant 0 : index
      %c0_21 = arith.constant 0 : index
      %22 = vector.load %arg5[%c0_20, %c0_21] : memref<1x32xf32, #tpu.memory_space<vmem>>, vector<1x32xf32>
      %23 = vector.broadcast %21 : vector<2x1xf32> to vector<2x32xf32>
      %24 = vector.broadcast %22 : vector<1x32xf32> to vector<2x32xf32>
      %25 = arith.mulf %23, %24 : vector<2x32xf32>
      %26 = arith.addf %20, %25 : vector<2x32xf32>
      %c0_22 = arith.constant 0 : index
      %c0_23 = arith.constant 0 : index
      %27 = vector.load %arg7[%c0_22, %c0_23] : memref<1x32xf32, #tpu.memory_space<vmem>>, vector<1x32xf32>
      %28 = vector.broadcast %27 : vector<1x32xf32> to vector<2x32xf32>
      %29 = arith.addf %26, %28 : vector<2x32xf32>
      %30 = math.tanh %29 : vector<2x32xf32>
      %c0_24 = arith.constant 0 : index
      %c0_25 = arith.constant 0 : index
      %31 = vector.load %arg8[%c0_24, %c0_25] : memref<32x128xf32, #tpu.memory_space<vmem>>, vector<32x128xf32>
      %cst_26 = arith.constant dense<0.000000e+00> : vector<2x128xf32>
      %32 = tpu.matmul %30, %31, %cst_26 {dimension_numbers = #tpu.dot_dimension_numbers<[1], [0], [0], [1], [0, 0, 1, 1], [], []>} : vector<2x32xf32>, vector<32x128xf32>, vector<2x128xf32> -> vector<2x128xf32>
      %c0_27 = arith.constant 0 : index
      %c0_28 = arith.constant 0 : index
      %33 = vector.load %arg9[%c0_27, %c0_28] : memref<1x128xf32, #tpu.memory_space<vmem>>, vector<1x128xf32>
      %34 = vector.broadcast %33 : vector<1x128xf32> to vector<2x128xf32>
      %35 = arith.addf %32, %34 : vector<2x128xf32>
      %c0_29 = arith.constant 0 : index
      %c0_30 = arith.constant 0 : index
      %36 = vector.load %arg10[%c0_29, %c0_30] : memref<2x128xf32, #tpu.memory_space<vmem>>, vector<2x128xf32>
      tpu.vector_store %arg10[%c0_29, %c0_30], %35 {strides = array<i32>} : memref<2x128xf32, #tpu.memory_space<vmem>>, vector<2x128xf32>,
    } else {
    }
    return
  }
  func.func @transform_0(%arg0: i32, %arg1: i32) -> (i32, i32, i32) {
    %c0_i32 = arith.constant 0 : i32
    %c0_i32_0 = arith.constant 0 : i32
    return %arg0, %arg1, %c0_i32 : i32, i32, i32
  }
  func.func @transform_1(%arg0: i32, %arg1: i32) -> (i32, i32) {
    %c0_i32 = arith.constant 0 : i32
    %c0_i32_0 = arith.constant 0 : i32
    return %arg0, %c0_i32 : i32, i32
  }
  func.func @transform_2(%arg0: i32, %arg1: i32) -> (i32, i32) {
    %c0_i32 = arith.constant 0 : i32
    %c0_i32_0 = arith.constant 0 : i32
    %c0_i32_1 = arith.constant 0 : i32
    return %c0_i32, %c0_i32_0 : i32, i32
  }
  func.func @transform_3(%arg0: i32, %arg1: i32) -> (i32, i32) {
    %c0_i32 = arith.constant 0 : i32
    %c0_i32_0 = arith.constant 0 : i32
    %c0_i32_1 = arith.constant 0 : i32
    return %c0_i32, %c0_i32_0 : i32, i32
  }
  func.func @transform_4(%arg0: i32, %arg1: i32) -> (i32, i32) {
    %c0_i32 = arith.constant 0 : i32
    %c0_i32_0 = arith.constant 0 : i32
    %c0_i32_1 = arith.constant 0 : i32
    return %c0_i32, %c0_i32_0 : i32, i32
  }
  func.func @transform_5(%arg0: i32, %arg1: i32) -> (i32, i32) {
    %c0_i32 = arith.constant 0 : i32
    %c0_i32_0 = arith.constant 0 : i32
    %c0_i32_1 = arith.constant 0 : i32
    return %c0_i32, %c0_i32_0 : i32, i32
  }
  func.func @transform_6(%arg0: i32, %arg1: i32) -> (i32, i32) {
    %c0_i32 = arith.constant 0 : i32
    %c0_i32_0 = arith.constant 0 : i32
    %c0_i32_1 = arith.constant 0 : i32
    return %c0_i32, %c0_i32_0 : i32, i32
  }
  func.func @transform_7(%arg0: i32, %arg1: i32) -> (i32, i32) {
    %c0_i32 = arith.constant 0 : i32
    %c0_i32_0 = arith.constant 0 : i32
    %c0_i32_1 = arith.constant 0 : i32
    return %c0_i32, %c0_i32_0 : i32, i32
  }
  func.func @transform_8(%arg0: i32, %arg1: i32) -> (i32, i32) {
    %c0_i32 = arith.constant 0 : i32
    %c0_i32_0 = arith.constant 0 : i32
    return %arg0, %c0_i32 : i32, i32
  }
}

module attributes {stable_mosaic.version = 11 : i64} {
  func.func @_head_kernel(%arg0: i32, %arg1: i32, %arg2: memref<2x8x32xf32, #tpu.memory_space<vmem>>, %arg3: memref<2x1xf32, #tpu.memory_space<vmem>>, %arg4: memref<32x32xf32, #tpu.memory_space<vmem>>, %arg5: memref<1x32xf32, #tpu.memory_space<vmem>>, %arg6: memref<32x32xf32, #tpu.memory_space<vmem>>, %arg7: memref<1x32xf32, #tpu.memory_space<vmem>>, %arg8: memref<32x128xf32, #tpu.memory_space<vmem>>, %arg9: memref<1x128xf32, #tpu.memory_space<vmem>>, %arg10: memref<2x128xf32, #tpu.memory_space<vmem>>, %arg11: memref<2x32xf32, #tpu.memory_space<vmem>>, %arg12: memref<2x32xf32, #tpu.memory_space<vmem>>) attributes {dimension_semantics = [#tpu.dimension_semantics<parallel>, #tpu.dimension_semantics<arbitrary>], iteration_bounds = array<i64: 1, 1>, scalar_prefetch = 0 : i64, scratch_operands = 2 : i64, tpu.core_type = #tpu.core_type<tc>, window_params = [{transform_indices = @transform_0, window_bounds = array<i64: 2, 8, 32>}, {transform_indices = @transform_1, window_bounds = array<i64: 2, 1>}, {pipeline_mode = #tpu.pipeline_mode<synchronous>, transform_indices = @transform_2, window_bounds = array<i64: 32, 32>}, {pipeline_mode = #tpu.pipeline_mode<synchronous>, transform_indices = @transform_3, window_bounds = array<i64: 1, 32>}, {pipeline_mode = #tpu.pipeline_mode<synchronous>, transform_indices = @transform_4, window_bounds = array<i64: 32, 32>}, {pipeline_mode = #tpu.pipeline_mode<synchronous>, transform_indices = @transform_5, window_bounds = array<i64: 1, 32>}, {pipeline_mode = #tpu.pipeline_mode<synchronous>, transform_indices = @transform_6, window_bounds = array<i64: 32, 128>}, {pipeline_mode = #tpu.pipeline_mode<synchronous>, transform_indices = @transform_7, window_bounds = array<i64: 1, 128>}, {transform_indices = @transform_8, window_bounds = array<i64: 2, 128>}]} {
    %c0 = arith.constant 0 : index
    %c0_0 = arith.constant 0 : index
    %c0_1 = arith.constant 0 : index
    %0 = vector.load %arg2[%c0, %c0_0, %c0_1] : memref<2x8x32xf32, #tpu.memory_space<vmem>>, vector<2x8x32xf32>
    %cst = arith.constant dense<0.000000e+00> : vector<2x32xf32>
    %1 = vector.multi_reduction <add>, %0, %cst [1] : vector<2x8x32xf32> to vector<2x32xf32>
    %c0_i32 = arith.constant 0 : i32
    %2 = arith.cmpi eq, %arg1, %c0_i32 : i32
    %3 = arith.extui %2 : i1 to i32
    %c0_i32_2 = arith.constant 0 : i32
    %4 = arith.cmpi ne, %3, %c0_i32_2 : i32
    scf.if %4 {
      %11 = vector.extract_strided_slice %0 {offsets = [0, 0, 0], sizes = [2, 1, 32], strides = [1, 1, 1]} : vector<2x8x32xf32> to vector<2x1x32xf32>
      %12 = vector.shape_cast %11 : vector<2x1x32xf32> to vector<2x32xf32>
      %c0_7 = arith.constant 0 : index
      %c0_8 = arith.constant 0 : index
      %13 = vector.load %arg11[%c0_7, %c0_8] : memref<2x32xf32, #tpu.memory_space<vmem>>, vector<2x32xf32>
      tpu.vector_store %arg11[%c0_7, %c0_8], %12 {strides = array<i32>} : memref<2x32xf32, #tpu.memory_space<vmem>>, vector<2x32xf32>,
      %c0_9 = arith.constant 0 : index
      %c0_10 = arith.constant 0 : index
      %14 = vector.load %arg12[%c0_9, %c0_10] : memref<2x32xf32, #tpu.memory_space<vmem>>, vector<2x32xf32>
      tpu.vector_store %arg12[%c0_9, %c0_10], %1 {strides = array<i32>} : memref<2x32xf32, #tpu.memory_space<vmem>>, vector<2x32xf32>,
    } else {
    }
    %c0_i32_3 = arith.constant 0 : i32
    %5 = arith.cmpi ne, %arg1, %c0_i32_3 : i32
    %6 = arith.extui %5 : i1 to i32
    %c0_i32_4 = arith.constant 0 : i32
    %7 = arith.cmpi ne, %6, %c0_i32_4 : i32
    scf.if %7 {
      %c0_7 = arith.constant 0 : index
      %c0_8 = arith.constant 0 : index
      %11 = vector.load %arg12[%c0_7, %c0_8] : memref<2x32xf32, #tpu.memory_space<vmem>>, vector<2x32xf32>
      %12 = arith.addf %11, %1 : vector<2x32xf32>
      %c0_9 = arith.constant 0 : index
      %c0_10 = arith.constant 0 : index
      %13 = vector.load %arg12[%c0_9, %c0_10] : memref<2x32xf32, #tpu.memory_space<vmem>>, vector<2x32xf32>
      tpu.vector_store %arg12[%c0_9, %c0_10], %12 {strides = array<i32>} : memref<2x32xf32, #tpu.memory_space<vmem>>, vector<2x32xf32>,
    } else {
    }
    %c0_i32_5 = arith.constant 0 : i32
    %8 = arith.cmpi eq, %arg1, %c0_i32_5 : i32
    %9 = arith.extui %8 : i1 to i32
    %c0_i32_6 = arith.constant 0 : i32
    %10 = arith.cmpi ne, %9, %c0_i32_6 : i32
    scf.if %10 {
      %c0_7 = arith.constant 0 : index
      %c0_8 = arith.constant 0 : index
      %11 = vector.load %arg11[%c0_7, %c0_8] : memref<2x32xf32, #tpu.memory_space<vmem>>, vector<2x32xf32>
      %c0_9 = arith.constant 0 : index
      %c0_10 = arith.constant 0 : index
      %12 = vector.load %arg12[%c0_9, %c0_10] : memref<2x32xf32, #tpu.memory_space<vmem>>, vector<2x32xf32>
      %13 = arith.subf %12, %11 : vector<2x32xf32>
      %cst_11 = arith.constant 0.142857149 : f32
      %14 = vector.broadcast %cst_11 : f32 to vector<2x32xf32>
      %15 = arith.mulf %13, %14 : vector<2x32xf32>
      %c0_12 = arith.constant 0 : index
      %c0_13 = arith.constant 0 : index
      %16 = vector.load %arg4[%c0_12, %c0_13] : memref<32x32xf32, #tpu.memory_space<vmem>>, vector<32x32xf32>
      %cst_14 = arith.constant dense<0.000000e+00> : vector<2x32xf32>
      %17 = tpu.matmul %11, %16, %cst_14 {dimension_numbers = #tpu.dot_dimension_numbers<[1], [0], [0], [1], [0, 0, 1, 1], [], []>} : vector<2x32xf32>, vector<32x32xf32>, vector<2x32xf32> -> vector<2x32xf32>
      %c0_15 = arith.constant 0 : index
      %c0_16 = arith.constant 0 : index
      %18 = vector.load %arg6[%c0_15, %c0_16] : memref<32x32xf32, #tpu.memory_space<vmem>>, vector<32x32xf32>
      %cst_17 = arith.constant dense<0.000000e+00> : vector<2x32xf32>
      %19 = tpu.matmul %15, %18, %cst_17 {dimension_numbers = #tpu.dot_dimension_numbers<[1], [0], [0], [1], [0, 0, 1, 1], [], []>} : vector<2x32xf32>, vector<32x32xf32>, vector<2x32xf32> -> vector<2x32xf32>
      %20 = arith.addf %17, %19 : vector<2x32xf32>
      %c0_18 = arith.constant 0 : index
      %c0_19 = arith.constant 0 : index
      %21 = vector.load %arg3[%c0_18, %c0_19] : memref<2x1xf32, #tpu.memory_space<vmem>>, vector<2x1xf32>
      %c0_20 = arith.constant 0 : index
      %c0_21 = arith.constant 0 : index
      %22 = vector.load %arg5[%c0_20, %c0_21] : memref<1x32xf32, #tpu.memory_space<vmem>>, vector<1x32xf32>
      %23 = vector.broadcast %21 : vector<2x1xf32> to vector<2x32xf32>
      %24 = vector.broadcast %22 : vector<1x32xf32> to vector<2x32xf32>
      %25 = arith.mulf %23, %24 : vector<2x32xf32>
      %26 = arith.addf %20, %25 : vector<2x32xf32>
      %c0_22 = arith.constant 0 : index
      %c0_23 = arith.constant 0 : index
      %27 = vector.load %arg7[%c0_22, %c0_23] : memref<1x32xf32, #tpu.memory_space<vmem>>, vector<1x32xf32>
      %28 = vector.broadcast %27 : vector<1x32xf32> to vector<2x32xf32>
      %29 = arith.addf %26, %28 : vector<2x32xf32>
      %30 = math.tanh %29 : vector<2x32xf32>
      %c0_24 = arith.constant 0 : index
      %c0_25 = arith.constant 0 : index
      %31 = vector.load %arg8[%c0_24, %c0_25] : memref<32x128xf32, #tpu.memory_space<vmem>>, vector<32x128xf32>
      %cst_26 = arith.constant dense<0.000000e+00> : vector<2x128xf32>
      %32 = tpu.matmul %30, %31, %cst_26 {dimension_numbers = #tpu.dot_dimension_numbers<[1], [0], [0], [1], [0, 0, 1, 1], [], []>} : vector<2x32xf32>, vector<32x128xf32>, vector<2x128xf32> -> vector<2x128xf32>
      %c0_27 = arith.constant 0 : index
      %c0_28 = arith.constant 0 : index
      %33 = vector.load %arg9[%c0_27, %c0_28] : memref<1x128xf32, #tpu.memory_space<vmem>>, vector<1x128xf32>
      %34 = vector.broadcast %33 : vector<1x128xf32> to vector<2x128xf32>
      %35 = arith.addf %32, %34 : vector<2x128xf32>
      %c0_29 = arith.constant 0 : index
      %c0_30 = arith.constant 0 : index
      %36 = vector.load %arg10[%c0_29, %c0_30] : memref<2x128xf32, #tpu.memory_space<vmem>>, vector<2x128xf32>
      tpu.vector_store %arg10[%c0_29, %c0_30], %35 {strides = array<i32>} : memref<2x128xf32, #tpu.memory_space<vmem>>, vector<2x128xf32>,
    } else {
    }
    return
  }
  func.func @transform_0(%arg0: i32, %arg1: i32) -> (i32, i32, i32) {
    %c0_i32 = arith.constant 0 : i32
    %c0_i32_0 = arith.constant 0 : i32
    return %arg0, %arg1, %c0_i32 : i32, i32, i32
  }
  func.func @transform_1(%arg0: i32, %arg1: i32) -> (i32, i32) {
    %c0_i32 = arith.constant 0 : i32
    %c0_i32_0 = arith.constant 0 : i32
    return %arg0, %c0_i32 : i32, i32
  }
  func.func @transform_2(%arg0: i32, %arg1: i32) -> (i32, i32) {
    %c0_i32 = arith.constant 0 : i32
    %c0_i32_0 = arith.constant 0 : i32
    %c0_i32_1 = arith.constant 0 : i32
    return %c0_i32, %c0_i32_0 : i32, i32
  }
  func.func @transform_3(%arg0: i32, %arg1: i32) -> (i32, i32) {
    %c0_i32 = arith.constant 0 : i32
    %c0_i32_0 = arith.constant 0 : i32
    %c0_i32_1 = arith.constant 0 : i32
    return %c0_i32, %c0_i32_0 : i32, i32
  }
  func.func @transform_4(%arg0: i32, %arg1: i32) -> (i32, i32) {
    %c0_i32 = arith.constant 0 : i32
    %c0_i32_0 = arith.constant 0 : i32
    %c0_i32_1 = arith.constant 0 : i32
    return %c0_i32, %c0_i32_0 : i32, i32
  }
  func.func @transform_5(%arg0: i32, %arg1: i32) -> (i32, i32) {
    %c0_i32 = arith.constant 0 : i32
    %c0_i32_0 = arith.constant 0 : i32
    %c0_i32_1 = arith.constant 0 : i32
    return %c0_i32, %c0_i32_0 : i32, i32
  }
  func.func @transform_6(%arg0: i32, %arg1: i32) -> (i32, i32) {
    %c0_i32 = arith.constant 0 : i32
    %c0_i32_0 = arith.constant 0 : i32
    %c0_i32_1 = arith.constant 0 : i32
    return %c0_i32, %c0_i32_0 : i32, i32
  }
  func.func @transform_7(%arg0: i32, %arg1: i32) -> (i32, i32) {
    %c0_i32 = arith.constant 0 : i32
    %c0_i32_0 = arith.constant 0 : i32
    %c0_i32_1 = arith.constant 0 : i32
    return %c0_i32, %c0_i32_0 : i32, i32
  }
  func.func @transform_8(%arg0: i32, %arg1: i32) -> (i32, i32) {
    %c0_i32 = arith.constant 0 : i32
    %c0_i32_0 = arith.constant 0 : i32
    return %arg0, %c0_i32 : i32, i32
  }
}

</mosaic_0001>

<llo_original>
// kernel: tpu_custom_call.1
$region0: #{tpu_custom_call.1}
  #allocation0 [shape = 'u32[]', space=smem, size = 0x4, offset = 0x4, fixed_abs, tag = 'smem constant byte address 0x4 - core index']
  #allocation1 [shape = 'u32[72,128]{1,0:T(1,128)}', space=vmem, size = 0x9000, scoped, tag = 'internal scratch']
  #allocation2 [shape = 'f32[2,32]{1,0:T(2,128)}', space=vmem, size = 0x400, scoped, tag = 'scratch operand']
  #allocation3 [shape = 'f32[2,32]{1,0:T(2,128)}', space=vmem, size = 0x400, scoped, tag = 'scratch operand']
  %s0 = inlined_call_operand.hbm [shape: f32[2,8,32], index: 0, kind: input, shape index: {}]
  %s1 = inlined_call_operand.vmem [shape: f32[2,1], index: 1, kind: input, shape index: {}]
  %s2 = inlined_call_operand.hbm [shape: f32[32,32], index: 2, kind: input, shape index: {}]
  %s3 = inlined_call_operand.vmem [shape: f32[1,32], index: 3, kind: input, shape index: {}]
  %s4 = inlined_call_operand.hbm [shape: f32[32,32], index: 4, kind: input, shape index: {}]
  %s5 = inlined_call_operand.vmem [shape: f32[1,32], index: 5, kind: input, shape index: {}]
  %s6 = inlined_call_operand.hbm [shape: f32[32,128], index: 6, kind: input, shape index: {}]
  %s7 = inlined_call_operand.vmem [shape: f32[1,128], index: 7, kind: input, shape index: {}]
  %s8 = inlined_call_operand.hbm [shape: f32[2,128], index: 8, kind: output, shape index: {}]
  %s9 = sld [smem:[#allocation0]]
  $region70: #{tpu_custom_call.1} parent=0
    _
  %s11 = ssub.s32 1, %s9
  %s12 = scalar_select 0, %s11, %s9
  $region1: #{tpu_custom_call.1} parent=0
    #allocation4 [shape = 'u8[8192]{0}', space=vmem, size = 0x2000, scoped, tag = 'input window, operand 0, single buffered']
    #allocation5 [shape = 's32[1]{0}', space=sflag, size = 0x4, scoped, tag = 'scoped memory for tpu_custom_call.1']
    #allocation6 [shape = 's32[1]{0}', space=sflag, size = 0x4, scoped, tag = 'scoped memory for tpu_custom_call.1']
    #allocation7 [shape = 'u8[16384]{0}', space=vmem, size = 0x4000, scoped, tag = 'input window, operand 2, single buffered']
    #allocation8 [shape = 's32[1]{0}', space=sflag, size = 0x4, scoped, tag = 'scoped memory for tpu_custom_call.1']
    #allocation9 [shape = 'u8[16384]{0}', space=vmem, size = 0x4000, scoped, tag = 'input window, operand 4, single buffered']
    #allocation10 [shape = 'u8[16384]{0}', space=vmem, size = 0x4000, scoped, tag = 'input window, operand 6, single buffered']
    #allocation11 [shape = 's32[1]{0}', space=sflag, size = 0x4, scoped, tag = 'scoped memory for tpu_custom_call.1']
    #allocation12 [shape = 'u8[1024]{0}', space=vmem, size = 0x400, scoped, tag = 'output window, operand 0, single buffered']
    %13 = vsyncpa [#allocation5], 0
    %14 = vsyncpa [#allocation8], 0
    %15 = vsyncpa [#allocation11], 0
    %16 = vsyncpa [#allocation6], 0
    // Predicated region
    $region2: #{tpu_custom_call.1} parent=1 // pred_check
      _
    $region3: #{tpu_custom_call.1} parent=1 // pred_check_branch
      %18 = sbr.rel (0) target = $region5
    $region4: #{tpu_custom_call.1} parent=1 // pred_region
      %20 = vsyncadd [#allocation5], 0
      %s21 = sshll.u32 %s0, 4
      %s22 = int_to_ptr.hbm [resolvable:$true] %s21
      %s23 = sshll.u32 [#allocation4], 4
      %s24 = int_to_ptr.vmem [resolvable:$true] %s23
      %29 = dma.hbm_to_vmem [thread:$0]  %s22, 256, %s24, [#allocation5], 128, 128, 8
    $region5: #{tpu_custom_call.1} parent=1 // pred_fallthru
      _
    // Predicated region
    $region6: #{tpu_custom_call.1} parent=1 // pred_check
      _
    $region7: #{tpu_custom_call.1} parent=1 // pred_check_branch
      %31 = sbr.rel (0) target = $region9
    $region8: #{tpu_custom_call.1} parent=1 // pred_region
      _
    $region9: #{tpu_custom_call.1} parent=1 // pred_fallthru
      _
    // Predicated region
    $region10: #{tpu_custom_call.1} parent=1 // pred_check
      _
    $region11: #{tpu_custom_call.1} parent=1 // pred_check_branch
      %33 = sbr.rel (0) target = $region13
    $region12: #{tpu_custom_call.1} parent=1 // pred_region
      %35 = vsyncadd [#allocation8], 0
      %s36 = sshll.u32 %s2, 4
      %s37 = int_to_ptr.hbm [resolvable:$true] %s36
      %s38 = sshll.u32 [#allocation7], 4
      %s39 = int_to_ptr.vmem [resolvable:$true] %s38
      %44 = dma.hbm_to_vmem [thread:$0]  %s37, 512, %s39, [#allocation8], 128, 128, 8
    $region13: #{tpu_custom_call.1} parent=1 // pred_fallthru
      _
    // Predicated region
    $region14: #{tpu_custom_call.1} parent=1 // pred_check
      _
    $region15: #{tpu_custom_call.1} parent=1 // pred_check_branch
      %46 = sbr.rel (0) target = $region17
    $region16: #{tpu_custom_call.1} parent=1 // pred_region
      _
    $region17: #{tpu_custom_call.1} parent=1 // pred_fallthru
      _
    // Predicated region
    $region18: #{tpu_custom_call.1} parent=1 // pred_check
      _
    $region19: #{tpu_custom_call.1} parent=1 // pred_check_branch
      %48 = sbr.rel (0) target = $region21
    $region20: #{tpu_custom_call.1} parent=1 // pred_region
      %50 = vsyncadd [#allocation8], 0
      %s51 = sshll.u32 %s4, 4
      %s52 = int_to_ptr.hbm [resolvable:$true] %s51
      %s53 = sshll.u32 [#allocation9], 4
      %s54 = int_to_ptr.vmem [resolvable:$true] %s53
      %59 = dma.hbm_to_vmem [thread:$0]  %s52, 512, %s54, [#allocation8], 128, 128, 8
    $region21: #{tpu_custom_call.1} parent=1 // pred_fallthru
      _
    // Predicated region
    $region22: #{tpu_custom_call.1} parent=1 // pred_check
      _
    $region23: #{tpu_custom_call.1} parent=1 // pred_check_branch
      %61 = sbr.rel (0) target = $region25
    $region24: #{tpu_custom_call.1} parent=1 // pred_region
      _
    $region25: #{tpu_custom_call.1} parent=1 // pred_fallthru
      _
    // Predicated region
    $region26: #{tpu_custom_call.1} parent=1 // pred_check
      _
    $region27: #{tpu_custom_call.1} parent=1 // pred_check_branch
      %63 = sbr.rel (0) target = $region29
    $region28: #{tpu_custom_call.1} parent=1 // pred_region
      %65 = vsyncadd [#allocation11], 0
      %s66 = sshll.u32 %s6, 4
      %s67 = int_to_ptr.hbm [resolvable:$true] %s66
      %s68 = sshll.u32 [#allocation10], 4
      %s69 = int_to_ptr.vmem [resolvable:$true] %s68
      %74 = dma.hbm_to_vmem [thread:$0]  %s67, 512, %s69, [#allocation11], 128, 128, 8
    $region29: #{tpu_custom_call.1} parent=1 // pred_fallthru
      _
    // Predicated region
    $region30: #{tpu_custom_call.1} parent=1 // pred_check
      _
    $region31: #{tpu_custom_call.1} parent=1 // pred_check_branch
      %76 = sbr.rel (0) target = $region33
    $region32: #{tpu_custom_call.1} parent=1 // pred_region
      _
    $region33: #{tpu_custom_call.1} parent=1 // pred_fallthru
      _
    // Predicated region
    $region34: #{tpu_custom_call.1} parent=1 // pred_check
      _
    $region35: #{tpu_custom_call.1} parent=1 // pred_check_branch
      %78 = sbr.rel (0) target = $region37
    $region36: #{tpu_custom_call.1} parent=1 // pred_region
      %80 = dma.done [#allocation5], 256
    $region37: #{tpu_custom_call.1} parent=1 // pred_fallthru
      _
    // Predicated region
    $region38: #{tpu_custom_call.1} parent=1 // pred_check
      _
    $region39: #{tpu_custom_call.1} parent=1 // pred_check_branch
      %82 = sbr.rel (0) target = $region41
    $region40: #{tpu_custom_call.1} parent=1 // pred_region
      %84 = dma.done [#allocation8], 512
    $region41: #{tpu_custom_call.1} parent=1 // pred_fallthru
      _
    // Predicated region
    $region42: #{tpu_custom_call.1} parent=1 // pred_check
      _
    $region43: #{tpu_custom_call.1} parent=1 // pred_check_branch
      %86 = sbr.rel (0) target = $region45
    $region44: #{tpu_custom_call.1} parent=1 // pred_region
      %88 = dma.done [#allocation8], 512
    $region45: #{tpu_custom_call.1} parent=1 // pred_fallthru
      _
    // Predicated region
    $region46: #{tpu_custom_call.1} parent=1 // pred_check
      _
    $region47: #{tpu_custom_call.1} parent=1 // pred_check_branch
      %90 = sbr.rel (0) target = $region49
    $region48: #{tpu_custom_call.1} parent=1 // pred_region
      %92 = dma.done [#allocation11], 512
    $region49: #{tpu_custom_call.1} parent=1 // pred_fallthru
      _
    %v93 = vld [vmem:[#allocation4] sm:$0xff]
    %v94 = vld [vmem:[#allocation4 + $0x8] sm:$0xff]
    %vm95 = vcmask 261120
    %v96 = vsel %vm95, %v93, 0.0
    %v97 = vrot.slane %v96, 4
    %v98 = vadd.f32 %v96, %v97
    %v99 = vrot.slane %v98, 2
    %v100 = vadd.f32 %v98, %v99
    %v101 = vrot.slane %v100, 1
    %v102 = vadd.f32 %v100, %v101
    %v103 = vsel %vm95, %v94, 0.0
    %v104 = vrot.slane %v103, 4
    %v105 = vadd.f32 %v103, %v104
    %v106 = vrot.slane %v105, 2
    %v107 = vadd.f32 %v105, %v106
    %v108 = vrot.slane %v107, 1
    %v109 = vadd.f32 %v107, %v108
    %p110 = scmp.eq.s32.totalorder 0, 0
    // Predicated region
    $region50: #{tpu_custom_call.1} parent=1 // pred_check
      %p111 = pneg %p110
    $region51: #{tpu_custom_call.1} parent=1 // pred_check_branch
      %113 = sbr.rel (%p111) target = $region53
    $region52: #{tpu_custom_call.1} parent=1 // pred_region
      %v116 = vrot.slane %v94, 7
      %vm117 = vcmask 1041409
      %v118 = vsel %vm117, %v116, %v93
      %vm120 = vcmask 254976
      %121 = vst.msk [vmem:[#allocation2] sm:$0x3] %vm120, %v118
      %v124 = vsel %vm117, %v109, %v102
      %126 = vst.msk [vmem:[#allocation3] sm:$0x3] %vm120, %v124
    $region53: #{tpu_custom_call.1} parent=1 // pred_fallthru
      _
    %p127 = scmp.ne.s32.totalorder 0, 0
    // Predicated region
    $region54: #{tpu_custom_call.1} parent=1 // pred_check
      %p128 = pneg %p127
    $region55: #{tpu_custom_call.1} parent=1 // pred_check_branch
      %130 = sbr.rel (%p128) target = $region57
    $region56: #{tpu_custom_call.1} parent=1 // pred_region
      %v131 = vld [vmem:[#allocation3] sm:$0x3]
      %vm134 = vcmask 1041409
      %v135 = vsel %vm134, %v109, %v102
      %v137 = vadd.f32 %v131, %v135
      %vm138 = vcmask 254976
      %139 = vst.msk [vmem:[#allocation3] sm:$0x3] %vm138, %v137
    $region57: #{tpu_custom_call.1} parent=1 // pred_fallthru
      _
    // Predicated region
    $region58: #{tpu_custom_call.1} parent=1 // pred_check
      %p140 = pneg %p110
    $region59: #{tpu_custom_call.1} parent=1 // pred_check_branch
      %142 = sbr.rel (%p140) target = $region61
    $region60: #{tpu_custom_call.1} parent=1 // pred_region
      %v143 = vld [vmem:[#allocation2] sm:$0x3]
      %v144 = vld [vmem:[#allocation3] sm:$0x3]
      %v145 = vsub.f32 %v144, %v143
      %v146 = vmul.f32 %v145, 0.14285715
      %v147 = vld [vmem:[#allocation7] sm:$0xff]
      %v148 = vld [vmem:[#allocation7 + $0x8] sm:$0xff]
      %v149 = vld [vmem:[#allocation7 + $0x10] sm:$0xff]
      %v150 = vld [vmem:[#allocation7 + $0x18] sm:$0xff]
      %v151 = vld [vmem:[#allocation9] sm:$0xff]
      %v152 = vld [vmem:[#allocation9 + $0x8] sm:$0xff]
      %v153 = vld [vmem:[#allocation9 + $0x10] sm:$0xff]
      %v154 = vld [vmem:[#allocation9 + $0x18] sm:$0xff]
      %v156 = vsel %vm95, %v146, 0
      %158 = vmatpush.msra.mxu0 0.0
      %159 = vmatpush.msra.mxu0 0.0
      %160 = vmatpush.msra.mxu0 0.0
      %161 = vmatpush.msra.mxu0 0.0
      %162 = vmatpush.msra.mxu0 0.0
      %163 = vmatpush.msra.mxu0 0.0
      %164 = vmatpush.msra.mxu0 0.0
      %165 = vmatpush.msra.mxu0 0.0
      %166 = vmatpush.msra.mxu0 0.0
      %167 = vmatpush.msra.mxu0 0.0
      %168 = vmatpush.msra.mxu0 0.0
      %169 = vmatpush.msra.mxu0 0.0
      %170 = vmatpush.msra.mxu0 %v154
      %171 = vmatpush.msra.mxu0 %v153
      %172 = vmatpush.msra.mxu0 %v152
      %173 = vmatpush.msra.mxu0 %v151
      %174 = vmatmul.f32.gmra.mxu0 %v156
      %v175 = vpop.f32.mrf.mxu0
      %v176 = vadd.f32 0.0, %v175
      %177 = vdwg.mxu0
      %v179 = vsel %vm95, %v143, 0
      %181 = vmatpush.msra.mxu0 0.0
      %182 = vmatpush.msra.mxu0 0.0
      %183 = vmatpush.msra.mxu0 0.0
      %184 = vmatpush.msra.mxu0 0.0
      %185 = vmatpush.msra.mxu0 0.0
      %186 = vmatpush.msra.mxu0 0.0
      %187 = vmatpush.msra.mxu0 0.0
      %188 = vmatpush.msra.mxu0 0.0
      %189 = vmatpush.msra.mxu0 0.0
      %190 = vmatpush.msra.mxu0 0.0
      %191 = vmatpush.msra.mxu0 0.0
      %192 = vmatpush.msra.mxu0 0.0
      %193 = vmatpush.msra.mxu0 %v150
      %194 = vmatpush.msra.mxu0 %v149
      %195 = vmatpush.msra.mxu0 %v148
      %196 = vmatpush.msra.mxu0 %v147
      %197 = vmatmul.f32.gmra.mxu0 %v179
      %v198 = vpop.f32.mrf.mxu0
      %v199 = vadd.f32 %v176, %v198
      %200 = vdwg.mxu0
      %v201 = vld [vmem:[%s1] sm:$0x3]
      %v202 = vld [vmem:[%s3] sm:$0x1]
      %204 = vset.pattern.permute.xlu0 0
      %205 = vperm.xlu0 %204, %v201
      %v206 = vpop.permute.xlu0 %205
      %v209 = vperm.slane %v202, 0
      %v211 = vmul.f32 %v206, %v209
      %v212 = vadd.f32 %v199, %v211
      %v213 = vld [vmem:[%s5] sm:$0x1]
      %v215 = vperm.slane %v213, 0
      %v217 = vadd.f32 %v212, %v215
      %v218 = vtanh.pop %v217
      %v219 = vld [vmem:[#allocation10] sm:$0xff]
      %v220 = vld [vmem:[#allocation10 + $0x8] sm:$0xff]
      %v221 = vld [vmem:[#allocation10 + $0x10] sm:$0xff]
      %v222 = vld [vmem:[#allocation10 + $0x18] sm:$0xff]
      %v223 = vld [vmem:[%s7] sm:$0x1]
      %v225 = vperm.slane %v223, 0
      %v228 = vsel %vm95, %v218, 0
      %230 = vmatpush.msra.mxu0 0.0
      %231 = vmatpush.msra.mxu0 0.0
      %232 = vmatpush.msra.mxu0 0.0
      %233 = vmatpush.msra.mxu0 0.0
      %234 = vmatpush.msra.mxu0 0.0
      %235 = vmatpush.msra.mxu0 0.0
      %236 = vmatpush.msra.mxu0 0.0
      %237 = vmatpush.msra.mxu0 0.0
      %238 = vmatpush.msra.mxu0 0.0
      %239 = vmatpush.msra.mxu0 0.0
      %240 = vmatpush.msra.mxu0 0.0
      %241 = vmatpush.msra.mxu0 0.0
      %242 = vmatpush.msra.mxu0 %v222
      %243 = vmatpush.msra.mxu0 %v221
      %244 = vmatpush.msra.mxu0 %v220
      %245 = vmatpush.msra.mxu0 %v219
      %246 = vmatmul.f32.gmra.mxu0 %v228
      %v247 = vpop.f32.mrf.mxu0
      %v248 = vadd.f32 %v225, %v247
      %249 = vdwg.mxu0
      %250 = vst [vmem:[#allocation12] sm:$0x3] %v248
    $region61: #{tpu_custom_call.1} parent=1 // pred_fallthru
      _
    // Predicated region
    $region62: #{tpu_custom_call.1} parent=1 // pred_check
      _
    $region63: #{tpu_custom_call.1} parent=1 // pred_check_branch
      %252 = sbr.rel (0) target = $region65
    $region64: #{tpu_custom_call.1} parent=1 // pred_region
      %254 = vsyncadd [#allocation6], 0
      %s256 = sshll.u32 [#allocation12], 4
      %s257 = int_to_ptr.vmem [resolvable:$true] %s256
      %s258 = sshll.u32 %s8, 4
      %s259 = int_to_ptr.hbm [resolvable:$true] %s258
      %261 = dma.vmem_to_hbm [thread:$0]  %s257, 32, %s259, [#allocation6]
    $region65: #{tpu_custom_call.1} parent=1 // pred_fallthru
      _
    // Predicated region
    $region66: #{tpu_custom_call.1} parent=1 // pred_check
      _
    $region67: #{tpu_custom_call.1} parent=1 // pred_check_branch
      %263 = sbr.rel (0) target = $region69
    $region68: #{tpu_custom_call.1} parent=1 // pred_region
      %265 = dma.done [#allocation6], 32
    $region69: #{tpu_custom_call.1} parent=1 // pred_fallthru
      _
    %266 = vsyncpa [#allocation5], 1
    %267 = vsyncpa [#allocation8], 1
    %268 = vsyncpa [#allocation11], 1
    %269 = vsyncpa [#allocation6], 1

// kernel: tpu_custom_call.1
$region0: #{tpu_custom_call.1}
  #allocation0 [shape = 'u32[]', space=smem, size = 0x4, offset = 0x4, fixed_abs, tag = 'smem constant byte address 0x4 - core index']
  #allocation1 [shape = 'u32[72,128]{1,0:T(1,128)}', space=vmem, size = 0x9000, scoped, tag = 'internal scratch']
  #allocation2 [shape = 'f32[2,32]{1,0:T(2,128)}', space=vmem, size = 0x400, scoped, tag = 'scratch operand']
  #allocation3 [shape = 'f32[2,32]{1,0:T(2,128)}', space=vmem, size = 0x400, scoped, tag = 'scratch operand']
  %s0 = inlined_call_operand.hbm [shape: f32[2,8,32], index: 0, kind: input, shape index: {}]
  %s1 = inlined_call_operand.vmem [shape: f32[2,1], index: 1, kind: input, shape index: {}]
  %s2 = inlined_call_operand.hbm [shape: f32[32,32], index: 2, kind: input, shape index: {}]
  %s3 = inlined_call_operand.vmem [shape: f32[1,32], index: 3, kind: input, shape index: {}]
  %s4 = inlined_call_operand.hbm [shape: f32[32,32], index: 4, kind: input, shape index: {}]
  %s5 = inlined_call_operand.vmem [shape: f32[1,32], index: 5, kind: input, shape index: {}]
  %s6 = inlined_call_operand.hbm [shape: f32[32,128], index: 6, kind: input, shape index: {}]
  %s7 = inlined_call_operand.vmem [shape: f32[1,128], index: 7, kind: input, shape index: {}]
  %s8 = inlined_call_operand.hbm [shape: f32[2,128], index: 8, kind: output, shape index: {}]
  %s9 = sld [smem:[#allocation0]]
  $region70: #{tpu_custom_call.1} parent=0
    _
  %s11 = ssub.s32 1, %s9
  %s12 = scalar_select 0, %s11, %s9
  $region1: #{tpu_custom_call.1} parent=0
    #allocation4 [shape = 'u8[8192]{0}', space=vmem, size = 0x2000, scoped, tag = 'input window, operand 0, single buffered']
    #allocation5 [shape = 's32[1]{0}', space=sflag, size = 0x4, scoped, tag = 'scoped memory for tpu_custom_call.1']
    #allocation6 [shape = 's32[1]{0}', space=sflag, size = 0x4, scoped, tag = 'scoped memory for tpu_custom_call.1']
    #allocation7 [shape = 'u8[16384]{0}', space=vmem, size = 0x4000, scoped, tag = 'input window, operand 2, single buffered']
    #allocation8 [shape = 's32[1]{0}', space=sflag, size = 0x4, scoped, tag = 'scoped memory for tpu_custom_call.1']
    #allocation9 [shape = 'u8[16384]{0}', space=vmem, size = 0x4000, scoped, tag = 'input window, operand 4, single buffered']
    #allocation10 [shape = 'u8[16384]{0}', space=vmem, size = 0x4000, scoped, tag = 'input window, operand 6, single buffered']
    #allocation11 [shape = 's32[1]{0}', space=sflag, size = 0x4, scoped, tag = 'scoped memory for tpu_custom_call.1']
    #allocation12 [shape = 'u8[1024]{0}', space=vmem, size = 0x400, scoped, tag = 'output window, operand 0, single buffered']
    %13 = vsyncpa [#allocation5], 0
    %14 = vsyncpa [#allocation8], 0
    %15 = vsyncpa [#allocation11], 0
    %16 = vsyncpa [#allocation6], 0
    // Predicated region
    $region2: #{tpu_custom_call.1} parent=1 // pred_check
      _
    $region3: #{tpu_custom_call.1} parent=1 // pred_check_branch
      %18 = sbr.rel (0) target = $region5
    $region4: #{tpu_custom_call.1} parent=1 // pred_region
      %20 = vsyncadd [#allocation5], 0
      %s21 = sshll.u32 %s0, 4
      %s22 = int_to_ptr.hbm [resolvable:$true] %s21
      %s23 = sshll.u32 [#allocation4], 4
      %s24 = int_to_ptr.vmem [resolvable:$true] %s23
      %29 = dma.hbm_to_vmem [thread:$0]  %s22, 256, %s24, [#allocation5], 128, 128, 8
    $region5: #{tpu_custom_call.1} parent=1 // pred_fallthru
      _
    // Predicated region
    $region6: #{tpu_custom_call.1} parent=1 // pred_check
      _
    $region7: #{tpu_custom_call.1} parent=1 // pred_check_branch
      %31 = sbr.rel (0) target = $region9
    $region8: #{tpu_custom_call.1} parent=1 // pred_region
      _
    $region9: #{tpu_custom_call.1} parent=1 // pred_fallthru
      _
    // Predicated region
    $region10: #{tpu_custom_call.1} parent=1 // pred_check
      _
    $region11: #{tpu_custom_call.1} parent=1 // pred_check_branch
      %33 = sbr.rel (0) target = $region13
    $region12: #{tpu_custom_call.1} parent=1 // pred_region
      %35 = vsyncadd [#allocation8], 0
      %s36 = sshll.u32 %s2, 4
      %s37 = int_to_ptr.hbm [resolvable:$true] %s36
      %s38 = sshll.u32 [#allocation7], 4
      %s39 = int_to_ptr.vmem [resolvable:$true] %s38
      %44 = dma.hbm_to_vmem [thread:$0]  %s37, 512, %s39, [#allocation8], 128, 128, 8
    $region13: #{tpu_custom_call.1} parent=1 // pred_fallthru
      _
    // Predicated region
    $region14: #{tpu_custom_call.1} parent=1 // pred_check
      _
    $region15: #{tpu_custom_call.1} parent=1 // pred_check_branch
      %46 = sbr.rel (0) target = $region17
    $region16: #{tpu_custom_call.1} parent=1 // pred_region
      _
    $region17: #{tpu_custom_call.1} parent=1 // pred_fallthru
      _
    // Predicated region
    $region18: #{tpu_custom_call.1} parent=1 // pred_check
      _
    $region19: #{tpu_custom_call.1} parent=1 // pred_check_branch
      %48 = sbr.rel (0) target = $region21
    $region20: #{tpu_custom_call.1} parent=1 // pred_region
      %50 = vsyncadd [#allocation8], 0
      %s51 = sshll.u32 %s4, 4
      %s52 = int_to_ptr.hbm [resolvable:$true] %s51
      %s53 = sshll.u32 [#allocation9], 4
      %s54 = int_to_ptr.vmem [resolvable:$true] %s53
      %59 = dma.hbm_to_vmem [thread:$0]  %s52, 512, %s54, [#allocation8], 128, 128, 8
    $region21: #{tpu_custom_call.1} parent=1 // pred_fallthru
      _
    // Predicated region
    $region22: #{tpu_custom_call.1} parent=1 // pred_check
      _
    $region23: #{tpu_custom_call.1} parent=1 // pred_check_branch
      %61 = sbr.rel (0) target = $region25
    $region24: #{tpu_custom_call.1} parent=1 // pred_region
      _
    $region25: #{tpu_custom_call.1} parent=1 // pred_fallthru
      _
    // Predicated region
    $region26: #{tpu_custom_call.1} parent=1 // pred_check
      _
    $region27: #{tpu_custom_call.1} parent=1 // pred_check_branch
      %63 = sbr.rel (0) target = $region29
    $region28: #{tpu_custom_call.1} parent=1 // pred_region
      %65 = vsyncadd [#allocation11], 0
      %s66 = sshll.u32 %s6, 4
      %s67 = int_to_ptr.hbm [resolvable:$true] %s66
      %s68 = sshll.u32 [#allocation10], 4
      %s69 = int_to_ptr.vmem [resolvable:$true] %s68
      %74 = dma.hbm_to_vmem [thread:$0]  %s67, 512, %s69, [#allocation11], 128, 128, 8
    $region29: #{tpu_custom_call.1} parent=1 // pred_fallthru
      _
    // Predicated region
    $region30: #{tpu_custom_call.1} parent=1 // pred_check
      _
    $region31: #{tpu_custom_call.1} parent=1 // pred_check_branch
      %76 = sbr.rel (0) target = $region33
    $region32: #{tpu_custom_call.1} parent=1 // pred_region
      _
    $region33: #{tpu_custom_call.1} parent=1 // pred_fallthru
      _
    // Predicated region
    $region34: #{tpu_custom_call.1} parent=1 // pred_check
      _
    $region35: #{tpu_custom_call.1} parent=1 // pred_check_branch
      %78 = sbr.rel (0) target = $region37
    $region36: #{tpu_custom_call.1} parent=1 // pred_region
      %80 = dma.done [#allocation5], 256
    $region37: #{tpu_custom_call.1} parent=1 // pred_fallthru
      _
    // Predicated region
    $region38: #{tpu_custom_call.1} parent=1 // pred_check
      _
    $region39: #{tpu_custom_call.1} parent=1 // pred_check_branch
      %82 = sbr.rel (0) target = $region41
    $region40: #{tpu_custom_call.1} parent=1 // pred_region
      %84 = dma.done [#allocation8], 512
    $region41: #{tpu_custom_call.1} parent=1 // pred_fallthru
      _
    // Predicated region
    $region42: #{tpu_custom_call.1} parent=1 // pred_check
      _
    $region43: #{tpu_custom_call.1} parent=1 // pred_check_branch
      %86 = sbr.rel (0) target = $region45
    $region44: #{tpu_custom_call.1} parent=1 // pred_region
      %88 = dma.done [#allocation8], 512
    $region45: #{tpu_custom_call.1} parent=1 // pred_fallthru
      _
    // Predicated region
    $region46: #{tpu_custom_call.1} parent=1 // pred_check
      _
    $region47: #{tpu_custom_call.1} parent=1 // pred_check_branch
      %90 = sbr.rel (0) target = $region49
    $region48: #{tpu_custom_call.1} parent=1 // pred_region
      %92 = dma.done [#allocation11], 512
    $region49: #{tpu_custom_call.1} parent=1 // pred_fallthru
      _
    %v93 = vld [vmem:[#allocation4] sm:$0xff]
    %v94 = vld [vmem:[#allocation4 + $0x8] sm:$0xff]
    %vm95 = vcmask 261120
    %v96 = vsel %vm95, %v93, 0.0
    %v97 = vrot.slane %v96, 4
    %v98 = vadd.f32 %v96, %v97
    %v99 = vrot.slane %v98, 2
    %v100 = vadd.f32 %v98, %v99
    %v101 = vrot.slane %v100, 1
    %v102 = vadd.f32 %v100, %v101
    %v103 = vsel %vm95, %v94, 0.0
    %v104 = vrot.slane %v103, 4
    %v105 = vadd.f32 %v103, %v104
    %v106 = vrot.slane %v105, 2
    %v107 = vadd.f32 %v105, %v106
    %v108 = vrot.slane %v107, 1
    %v109 = vadd.f32 %v107, %v108
    %p110 = scmp.eq.s32.totalorder 0, 0
    // Predicated region
    $region50: #{tpu_custom_call.1} parent=1 // pred_check
      %p111 = pneg %p110
    $region51: #{tpu_custom_call.1} parent=1 // pred_check_branch
      %113 = sbr.rel (%p111) target = $region53
    $region52: #{tpu_custom_call.1} parent=1 // pred_region
      %v116 = vrot.slane %v94, 7
      %vm117 = vcmask 1041409
      %v118 = vsel %vm117, %v116, %v93
      %vm120 = vcmask 254976
      %121 = vst.msk [vmem:[#allocation2] sm:$0x3] %vm120, %v118
      %v124 = vsel %vm117, %v109, %v102
      %126 = vst.msk [vmem:[#allocation3] sm:$0x3] %vm120, %v124
    $region53: #{tpu_custom_call.1} parent=1 // pred_fallthru
      _
    %p127 = scmp.ne.s32.totalorder 0, 0
    // Predicated region
    $region54: #{tpu_custom_call.1} parent=1 // pred_check
      %p128 = pneg %p127
    $region55: #{tpu_custom_call.1} parent=1 // pred_check_branch
      %130 = sbr.rel (%p128) target = $region57
    $region56: #{tpu_custom_call.1} parent=1 // pred_region
      %v131 = vld [vmem:[#allocation3] sm:$0x3]
      %vm134 = vcmask 1041409
      %v135 = vsel %vm134, %v109, %v102
      %v137 = vadd.f32 %v131, %v135
      %vm138 = vcmask 254976
      %139 = vst.msk [vmem:[#allocation3] sm:$0x3] %vm138, %v137
    $region57: #{tpu_custom_call.1} parent=1 // pred_fallthru
      _
    // Predicated region
    $region58: #{tpu_custom_call.1} parent=1 // pred_check
      %p140 = pneg %p110
    $region59: #{tpu_custom_call.1} parent=1 // pred_check_branch
      %142 = sbr.rel (%p140) target = $region61
    $region60: #{tpu_custom_call.1} parent=1 // pred_region
      %v143 = vld [vmem:[#allocation2] sm:$0x3]
      %v144 = vld [vmem:[#allocation3] sm:$0x3]
      %v145 = vsub.f32 %v144, %v143
      %v146 = vmul.f32 %v145, 0.14285715
      %v147 = vld [vmem:[#allocation7] sm:$0xff]
      %v148 = vld [vmem:[#allocation7 + $0x8] sm:$0xff]
      %v149 = vld [vmem:[#allocation7 + $0x10] sm:$0xff]
      %v150 = vld [vmem:[#allocation7 + $0x18] sm:$0xff]
      %v151 = vld [vmem:[#allocation9] sm:$0xff]
      %v152 = vld [vmem:[#allocation9 + $0x8] sm:$0xff]
      %v153 = vld [vmem:[#allocation9 + $0x10] sm:$0xff]
      %v154 = vld [vmem:[#allocation9 + $0x18] sm:$0xff]
      %v156 = vsel %vm95, %v146, 0
      %158 = vmatpush.msra.mxu0 0.0
      %159 = vmatpush.msra.mxu0 0.0
      %160 = vmatpush.msra.mxu0 0.0
      %161 = vmatpush.msra.mxu0 0.0
      %162 = vmatpush.msra.mxu0 0.0
      %163 = vmatpush.msra.mxu0 0.0
      %164 = vmatpush.msra.mxu0 0.0
      %165 = vmatpush.msra.mxu0 0.0
      %166 = vmatpush.msra.mxu0 0.0
      %167 = vmatpush.msra.mxu0 0.0
      %168 = vmatpush.msra.mxu0 0.0
      %169 = vmatpush.msra.mxu0 0.0
      %170 = vmatpush.msra.mxu0 %v154
      %171 = vmatpush.msra.mxu0 %v153
      %172 = vmatpush.msra.mxu0 %v152
      %173 = vmatpush.msra.mxu0 %v151
      %174 = vmatmul.f32.gmra.mxu0 %v156
      %v175 = vpop.f32.mrf.mxu0
      %v176 = vadd.f32 0.0, %v175
      %177 = vdwg.mxu0
      %v179 = vsel %vm95, %v143, 0
      %181 = vmatpush.msra.mxu0 0.0
      %182 = vmatpush.msra.mxu0 0.0
      %183 = vmatpush.msra.mxu0 0.0
      %184 = vmatpush.msra.mxu0 0.0
      %185 = vmatpush.msra.mxu0 0.0
      %186 = vmatpush.msra.mxu0 0.0
      %187 = vmatpush.msra.mxu0 0.0
      %188 = vmatpush.msra.mxu0 0.0
      %189 = vmatpush.msra.mxu0 0.0
      %190 = vmatpush.msra.mxu0 0.0
      %191 = vmatpush.msra.mxu0 0.0
      %192 = vmatpush.msra.mxu0 0.0
      %193 = vmatpush.msra.mxu0 %v150
      %194 = vmatpush.msra.mxu0 %v149
      %195 = vmatpush.msra.mxu0 %v148
      %196 = vmatpush.msra.mxu0 %v147
      %197 = vmatmul.f32.gmra.mxu0 %v179
      %v198 = vpop.f32.mrf.mxu0
      %v199 = vadd.f32 %v176, %v198
      %200 = vdwg.mxu0
      %v201 = vld [vmem:[%s1] sm:$0x3]
      %v202 = vld [vmem:[%s3] sm:$0x1]
      %204 = vset.pattern.permute.xlu0 0
      %205 = vperm.xlu0 %204, %v201
      %v206 = vpop.permute.xlu0 %205
      %v209 = vperm.slane %v202, 0
      %v211 = vmul.f32 %v206, %v209
      %v212 = vadd.f32 %v199, %v211
      %v213 = vld [vmem:[%s5] sm:$0x1]
      %v215 = vperm.slane %v213, 0
      %v217 = vadd.f32 %v212, %v215
      %v218 = vtanh.pop %v217
      %v219 = vld [vmem:[#allocation10] sm:$0xff]
      %v220 = vld [vmem:[#allocation10 + $0x8] sm:$0xff]
      %v221 = vld [vmem:[#allocation10 + $0x10] sm:$0xff]
      %v222 = vld [vmem:[#allocation10 + $0x18] sm:$0xff]
      %v223 = vld [vmem:[%s7] sm:$0x1]
      %v225 = vperm.slane %v223, 0
      %v228 = vsel %vm95, %v218, 0
      %230 = vmatpush.msra.mxu0 0.0
      %231 = vmatpush.msra.mxu0 0.0
      %232 = vmatpush.msra.mxu0 0.0
      %233 = vmatpush.msra.mxu0 0.0
      %234 = vmatpush.msra.mxu0 0.0
      %235 = vmatpush.msra.mxu0 0.0
      %236 = vmatpush.msra.mxu0 0.0
      %237 = vmatpush.msra.mxu0 0.0
      %238 = vmatpush.msra.mxu0 0.0
      %239 = vmatpush.msra.mxu0 0.0
      %240 = vmatpush.msra.mxu0 0.0
      %241 = vmatpush.msra.mxu0 0.0
      %242 = vmatpush.msra.mxu0 %v222
      %243 = vmatpush.msra.mxu0 %v221
      %244 = vmatpush.msra.mxu0 %v220
      %245 = vmatpush.msra.mxu0 %v219
      %246 = vmatmul.f32.gmra.mxu0 %v228
      %v247 = vpop.f32.mrf.mxu0
      %v248 = vadd.f32 %v225, %v247
      %249 = vdwg.mxu0
      %250 = vst [vmem:[#allocation12] sm:$0x3] %v248
    $region61: #{tpu_custom_call.1} parent=1 // pred_fallthru
      _
    // Predicated region
    $region62: #{tpu_custom_call.1} parent=1 // pred_check
      _
    $region63: #{tpu_custom_call.1} parent=1 // pred_check_branch
      %252 = sbr.rel (0) target = $region65
    $region64: #{tpu_custom_call.1} parent=1 // pred_region
      %254 = vsyncadd [#allocation6], 0
      %s256 = sshll.u32 [#allocation12], 4
      %s257 = int_to_ptr.vmem [resolvable:$true] %s256
      %s258 = sshll.u32 %s8, 4
      %s259 = int_to_ptr.hbm [resolvable:$true] %s258
      %261 = dma.vmem_to_hbm [thread:$0]  %s257, 32, %s259, [#allocation6]
    $region65: #{tpu_custom_call.1} parent=1 // pred_fallthru
      _
    // Predicated region
    $region66: #{tpu_custom_call.1} parent=1 // pred_check
      _
    $region67: #{tpu_custom_call.1} parent=1 // pred_check_branch
      %263 = sbr.rel (0) target = $region69
    $region68: #{tpu_custom_call.1} parent=1 // pred_region
      %265 = dma.done [#allocation6], 32
    $region69: #{tpu_custom_call.1} parent=1 // pred_fallthru
      _
    %266 = vsyncpa [#allocation5], 1
    %267 = vsyncpa [#allocation8], 1
    %268 = vsyncpa [#allocation11], 1
    %269 = vsyncpa [#allocation6], 1

</llo_original>
